<compile_context>
chip_gen: v6e
topology: v6e:2x2x1
jax: 0.10.0
libtpu: 0.0.40
codegen_flags: <defaults>
</compile_context>

<pallas_src>
import jax
import jax.numpy as jnp
from jax import lax
from jax.experimental import pallas as pl
from jax.experimental.pallas import tpu as pltpu


def _mlp_kernel(x_ref, w1_ref, b1_ref, w2_ref, b2_ref, w3_ref, b3_ref, o_ref):
    # x_ref: (TB, D) input dtype; w{1,2,3}_ref: (out, in) compute dtype;
    # b{1,2,3}_ref: (out, 1) f32; o_ref: (1, TB) f32.
    cdt = w1_ref.dtype
    x = x_ref[...].astype(cdt)                                 # (TB, 42)

    # Layer 1: contract the feature axis of both operands -> (64, TB).
    # Batch lands on the 128-lane axis; no HBM-side transpose needed.
    h1 = lax.dot_general(w1_ref[...], x, (((1,), (1,)), ((), ())),
                         preferred_element_type=jnp.float32) + b1_ref[...]
    h1 = jnp.maximum(h1, 0.0)            # ReLU; Dropout(0.1) == identity (eval)

    # Layer 2: (32, 64) @ (64, TB) -> (32, TB).
    h2 = jnp.dot(w2_ref[...], h1.astype(cdt),
                 preferred_element_type=jnp.float32) + b2_ref[...]
    h2 = jnp.maximum(h2, 0.0)            # ReLU; Dropout(0.1) == identity (eval)

    # Layer 3 + Tanh: (1, 32) @ (32, TB) -> (1, TB), lane-dense store.
    h3 = jnp.dot(w3_ref[...], h2.astype(cdt),
                 preferred_element_type=jnp.float32) + b3_ref[...]
    o_ref[...] = jnp.tanh(h3)


def _round_up(v, m):
    return (v + m - 1) // m * m


def simple_value_network_forward(x, params, *, block_batch=8192,
                                 compute_dtype=jnp.float32):
    """Fused 3-layer MLP forward on TPU via Pallas.

    x: (B, 42) float32; params: w1 (42,64), b1 (1,64), w2 (64,32), b2 (1,32),
    w3 (32,1), b3 (1,1).  Returns (B, 1) float32.
    """
    B, D = x.shape

    # Tile size: multiple of 128 (lane width), never larger than the padded
    # batch, and capped so the grid keeps >= 2 steps when B allows it
    # (v7x dual-TensorCore split via dimension_semantics=("parallel",)).
    TB = min(int(block_batch), _round_up(B, 128))
    if B >= 256:
        TB = min(TB, _round_up(_round_up(B, 128) // 2, 128))
    assert TB % 128 == 0

    num_tiles = pl.cdiv(B, TB)
    B_pad = num_tiles * TB
    if B_pad != B:
        # Only pad when B is not a tile multiple; hot path makes zero copies.
        x = jnp.pad(x, ((0, B_pad - B), (0, 0)))

    w1T = params["w1"].T.astype(compute_dtype)   # (64, D)
    w2T = params["w2"].T.astype(compute_dtype)   # (32, 64)
    w3T = params["w3"].T.astype(compute_dtype)   # (1, 32)
    b1T = params["b1"].T.astype(jnp.float32)     # (64, 1)
    b2T = params["b2"].T.astype(jnp.float32)     # (32, 1)
    b3T = params["b3"].T.astype(jnp.float32)     # (1, 1)

    # Weights/biases: full-array blocks, constant index_map -> VMEM-resident.
    resident = lambda a: pl.BlockSpec(a.shape, lambda i: (0,) * a.ndim)

    param_bytes = sum(int(a.size) * a.dtype.itemsize
                      for a in (w1T, b1T, w2T, b2T, w3T, b3T))
    cost = pl.CostEstimate(
        flops=2 * B_pad * (D * 64 + 64 * 32 + 32 * 1),
        transcendentals=B_pad,                                   # tanh per row
        bytes_accessed=B_pad * D * x.dtype.itemsize + B_pad * 4 + param_bytes,
    )

    out = pl.pallas_call(
        _mlp_kernel,
        out_shape=jax.ShapeDtypeStruct((1, B_pad), jnp.float32),
        grid_spec=pltpu.PrefetchScalarGridSpec(
            num_scalar_prefetch=0,
            grid=(num_tiles,),
            in_specs=[
                pl.BlockSpec((TB, D), lambda i: (i, 0)),   # streamed row-major tile
                resident(w1T), resident(b1T),
                resident(w2T), resident(b2T),
                resident(w3T), resident(b3T),
            ],
            out_specs=pl.BlockSpec((1, TB), lambda i: (0, i)),   # lane-dense
        ),
        compiler_params=pltpu.CompilerParams(
            dimension_semantics=("parallel",),           # v7x: shard over 2 TCs
            vmem_limit_bytes=32 * 1024 * 1024,           # safe on v5e/v6e/v7x
        ),
        cost_estimate=cost,
    )(x, w1T, b1T, w2T, b2T, w3T, b3T)

    return out[0, :B].reshape(B, 1)


def simple_value_network_apply(x, params, *, block_batch=8192,
                               compute_dtype=jnp.float32, min_pallas_batch=512):
    """Dispatcher: tiny batches are pure launch overhead -> plain JAX fallback."""
    if x.shape[0] < min_pallas_batch:
        return reference_forward(x, params)
    return simple_value_network_forward(
        x, params, block_batch=block_batch, compute_dtype=compute_dtype)


def init_params(key, input_size=42):
    """Deterministic init mimicking torch.nn.Linear default (U(-1/sqrt(fan_in), +))."""
    dims = [(input_size, 64), (64, 32), (32, 1)]
    params = {}
    for i, (fan_in, fan_out) in enumerate(dims, start=1):
        key, kw, kb = jax.random.split(key, 3)
        bound = 1.0 / jnp.sqrt(jnp.float32(fan_in))
        params[f"w{i}"] = jax.random.uniform(
            kw, (fan_in, fan_out), jnp.float32, -bound, bound)
        params[f"b{i}"] = jax.random.uniform(
            kb, (1, fan_out), jnp.float32, -bound, bound)
    return params


def reference_forward(x, params):
    """Plain-JAX reference for correctness checking."""
    h1 = jnp.maximum(x @ params["w1"] + params["b1"], 0.0)
    h2 = jnp.maximum(h1 @ params["w2"] + params["b2"], 0.0)
    return jnp.tanh(h2 @ params["w3"] + params["b3"])


if __name__ == "__main__":
    key = jax.random.PRNGKey(0)
    key, kx = jax.random.split(key)

    B, INPUT_SIZE = 640, 42      # Connect Four board: 6*7 = 42 cells
    x = jax.random.normal(kx, (B, INPUT_SIZE), jnp.float32)
    params = init_params(key, INPUT_SIZE)
    y_ref = reference_forward(x, params)

    # f32 compute path, small tile -> exercises a multi-step grid + batch padding.
    y32 = jax.block_until_ready(
        simple_value_network_forward(x, params, block_batch=256,
                                     compute_dtype=jnp.float32))
    assert y32.shape == (B, 1)
    assert jnp.allclose(y32, y_ref, atol=1e-4, rtol=1e-4), "f32 mismatch vs reference"

    # Default config (TB auto-capped for a 2-step grid) with bf16 MXU inputs.
    ybf = jax.block_until_ready(
        simple_value_network_forward(x, params, compute_dtype=jnp.bfloat16))
    assert ybf.shape == (B, 1)
    assert jnp.allclose(ybf, y_ref, atol=5e-2, rtol=5e-2), "bf16 mismatch vs reference"

    print("KERNEL_OK")
</pallas_src>

<mosaic_0001>
module attributes {stable_mosaic.version = 11 : i64} {
  func.func @_mlp_kernel(%arg0: i32, %arg1: memref<256x42xf32, #tpu.memory_space<vmem>>, %arg2: memref<64x42xf32, #tpu.memory_space<vmem>>, %arg3: memref<64x1xf32, #tpu.memory_space<vmem>>, %arg4: memref<32x64xf32, #tpu.memory_space<vmem>>, %arg5: memref<32x1xf32, #tpu.memory_space<vmem>>, %arg6: memref<1x32xf32, #tpu.memory_space<vmem>>, %arg7: memref<1x1xf32, #tpu.memory_space<vmem>>, %arg8: memref<1x256xf32, #tpu.memory_space<vmem>>) attributes {dimension_semantics = [#tpu.dimension_semantics<parallel>], iteration_bounds = array<i64: 3>, scalar_prefetch = 0 : i64, scratch_operands = 0 : i64, tpu.core_type = #tpu.core_type<tc>, window_params = [{transform_indices = @transform_0, window_bounds = array<i64: 256, 42>}, {pipeline_mode = #tpu.pipeline_mode<synchronous>, transform_indices = @transform_1, window_bounds = array<i64: 64, 42>}, {pipeline_mode = #tpu.pipeline_mode<synchronous>, transform_indices = @transform_2, window_bounds = array<i64: 64, 1>}, {pipeline_mode = #tpu.pipeline_mode<synchronous>, transform_indices = @transform_3, window_bounds = array<i64: 32, 64>}, {pipeline_mode = #tpu.pipeline_mode<synchronous>, transform_indices = @transform_4, window_bounds = array<i64: 32, 1>}, {pipeline_mode = #tpu.pipeline_mode<synchronous>, transform_indices = @transform_5, window_bounds = array<i64: 1, 32>}, {pipeline_mode = #tpu.pipeline_mode<synchronous>, transform_indices = @transform_6, window_bounds = array<i64: 1, 1>}, {transform_indices = @transform_7, window_bounds = array<i64: 1, 256>}]} {
    %c0 = arith.constant 0 : index
    %c0_0 = arith.constant 0 : index
    %0 = vector.load %arg1[%c0, %c0_0] : memref<256x42xf32, #tpu.memory_space<vmem>>, vector<256x42xf32>
    %c0_1 = arith.constant 0 : index
    %c0_2 = arith.constant 0 : index
    %1 = vector.load %arg2[%c0_1, %c0_2] : memref<64x42xf32, #tpu.memory_space<vmem>>, vector<64x42xf32>
    %cst = arith.constant dense<0.000000e+00> : vector<64x256xf32>
    %2 = tpu.matmul %1, %0, %cst {dimension_numbers = #tpu.dot_dimension_numbers<[1], [1], [0], [0], [0, 0, 1, 0], [], []>} : vector<64x42xf32>, vector<256x42xf32>, vector<64x256xf32> -> vector<64x256xf32>
    %c0_3 = arith.constant 0 : index
    %c0_4 = arith.constant 0 : index
    %3 = vector.load %arg3[%c0_3, %c0_4] : memref<64x1xf32, #tpu.memory_space<vmem>>, vector<64x1xf32>
    %4 = vector.broadcast %3 : vector<64x1xf32> to vector<64x256xf32>
    %5 = arith.addf %2, %4 : vector<64x256xf32>
    %cst_5 = arith.constant 0.000000e+00 : f32
    %6 = vector.broadcast %cst_5 : f32 to vector<64x256xf32>
    %7 = arith.maximumf %5, %6 : vector<64x256xf32>
    %c0_6 = arith.constant 0 : index
    %c0_7 = arith.constant 0 : index
    %8 = vector.load %arg4[%c0_6, %c0_7] : memref<32x64xf32, #tpu.memory_space<vmem>>, vector<32x64xf32>
    %cst_8 = arith.constant dense<0.000000e+00> : vector<32x256xf32>
    %9 = tpu.matmul %8, %7, %cst_8 {dimension_numbers = #tpu.dot_dimension_numbers<[1], [0], [0], [1], [0, 0, 1, 1], [], []>} : vector<32x64xf32>, vector<64x256xf32>, vector<32x256xf32> -> vector<32x256xf32>
    %c0_9 = arith.constant 0 : index
    %c0_10 = arith.constant 0 : index
    %10 = vector.load %arg5[%c0_9, %c0_10] : memref<32x1xf32, #tpu.memory_space<vmem>>, vector<32x1xf32>
    %11 = vector.broadcast %10 : vector<32x1xf32> to vector<32x256xf32>
    %12 = arith.addf %9, %11 : vector<32x256xf32>
    %cst_11 = arith.constant 0.000000e+00 : f32
    %13 = vector.broadcast %cst_11 : f32 to vector<32x256xf32>
    %14 = arith.maximumf %12, %13 : vector<32x256xf32>
    %c0_12 = arith.constant 0 : index
    %c0_13 = arith.constant 0 : index
    %15 = vector.load %arg6[%c0_12, %c0_13] : memref<1x32xf32, #tpu.memory_space<vmem>>, vector<1x32xf32>
    %cst_14 = arith.constant dense<0.000000e+00> : vector<1x256xf32>
    %16 = tpu.matmul %15, %14, %cst_14 {dimension_numbers = #tpu.dot_dimension_numbers<[1], [0], [0], [1], [0, 0, 1, 1], [], []>} : vector<1x32xf32>, vector<32x256xf32>, vector<1x256xf32> -> vector<1x256xf32>
    %c0_15 = arith.constant 0 : index
    %c0_16 = arith.constant 0 : index
    %17 = vector.load %arg7[%c0_15, %c0_16] : memref<1x1xf32, #tpu.memory_space<vmem>>, vector<1x1xf32>
    %18 = vector.broadcast %17 : vector<1x1xf32> to vector<1x256xf32>
    %19 = arith.addf %16, %18 : vector<1x256xf32>
    %20 = math.tanh %19 : vector<1x256xf32>
    %c0_17 = arith.constant 0 : index
    %c0_18 = arith.constant 0 : index
    %21 = vector.load %arg8[%c0_17, %c0_18] : memref<1x256xf32, #tpu.memory_space<vmem>>, vector<1x256xf32>
    tpu.vector_store %arg8[%c0_17, %c0_18], %20 {strides = array<i32>} : memref<1x256xf32, #tpu.memory_space<vmem>>, vector<1x256xf32>,
    return
  }
  func.func @transform_0(%arg0: i32) -> (i32, i32) {
    %c0_i32 = arith.constant 0 : i32
    %c0_i32_0 = arith.constant 0 : i32
    return %arg0, %c0_i32 : i32, i32
  }
  func.func @transform_1(%arg0: i32) -> (i32, i32) {
    %c0_i32 = arith.constant 0 : i32
    %c0_i32_0 = arith.constant 0 : i32
    %c0_i32_1 = arith.constant 0 : i32
    return %c0_i32, %c0_i32_0 : i32, i32
  }
  func.func @transform_2(%arg0: i32) -> (i32, i32) {
    %c0_i32 = arith.constant 0 : i32
    %c0_i32_0 = arith.constant 0 : i32
    %c0_i32_1 = arith.constant 0 : i32
    return %c0_i32, %c0_i32_0 : i32, i32
  }
  func.func @transform_3(%arg0: i32) -> (i32, i32) {
    %c0_i32 = arith.constant 0 : i32
    %c0_i32_0 = arith.constant 0 : i32
    %c0_i32_1 = arith.constant 0 : i32
    return %c0_i32, %c0_i32_0 : i32, i32
  }
  func.func @transform_4(%arg0: i32) -> (i32, i32) {
    %c0_i32 = arith.constant 0 : i32
    %c0_i32_0 = arith.constant 0 : i32
    %c0_i32_1 = arith.constant 0 : i32
    return %c0_i32, %c0_i32_0 : i32, i32
  }
  func.func @transform_5(%arg0: i32) -> (i32, i32) {
    %c0_i32 = arith.constant 0 : i32
    %c0_i32_0 = arith.constant 0 : i32
    %c0_i32_1 = arith.constant 0 : i32
    return %c0_i32, %c0_i32_0 : i32, i32
  }
  func.func @transform_6(%arg0: i32) -> (i32, i32) {
    %c0_i32 = arith.constant 0 : i32
    %c0_i32_0 = arith.constant 0 : i32
    %c0_i32_1 = arith.constant 0 : i32
    return %c0_i32, %c0_i32_0 : i32, i32
  }
  func.func @transform_7(%arg0: i32) -> (i32, i32) {
    %c0_i32 = arith.constant 0 : i32
    %c0_i32_0 = arith.constant 0 : i32
    return %c0_i32, %arg0 : i32, i32
  }
}

</mosaic_0001>

<llo_original>
// kernel: tpu_custom_call.1
$region0: #{tpu_custom_call.1}
  #allocation0 [shape = 'u32[]', space=smem, size = 0x4, offset = 0x4, fixed_abs, tag = 'smem constant byte address 0x4 - core index']
  #allocation1 [shape = 'u32[144,128]{1,0:T(1,128)}', space=vmem, size = 0x12000, scoped, tag = 'internal scratch']
  #allocation2 [shape = 'f32[1,1]{1,0:T(1,128)S(1)}', space=vmem, size = 0x200, scoped, tag = 'scoped memory for tpu_custom_call.1']
  %s0 = inlined_call_operand.vmem [shape: f32[768,42], index: 0, kind: input, shape index: {}]
  %s1 = inlined_call_operand.vmem [shape: f32[64,42], index: 1, kind: input, shape index: {}]
  %s2 = inlined_call_operand.vmem [shape: f32[64,1], index: 2, kind: input, shape index: {}]
  %s3 = inlined_call_operand.vmem [shape: f32[32,64], index: 3, kind: input, shape index: {}]
  %s4 = inlined_call_operand.vmem [shape: f32[32,1], index: 4, kind: input, shape index: {}]
  %s5 = inlined_call_operand.vmem [shape: f32[1,32], index: 5, kind: input, shape index: {}]
  %s6 = inlined_call_operand.<no memory space> [shape: f32[1,1], index: 6, kind: input, shape index: {}]
  %s7 = inlined_call_operand.hbm [shape: f32[1,768], index: 7, kind: output, shape index: {}]
  %s8 = sld [smem:[#allocation0]]
  $region61: #{tpu_custom_call.1} parent=0
    _
  %s10 = ssub.s32 1, %s8
  %s11 = scalar_select 0, %s10, %s8
  %v12 = vstv %s6
  %13 = vst [vmem:[#allocation2] sm:$0x1] %v12
  $region1: #{tpu_custom_call.1} parent=0
    #allocation3 [shape = 'u8[2048]{0}', space=vmem, size = 0x800, scoped, tag = 'output window, operand 0']
    #allocation4 [shape = 's32[2]{0}', space=sflag, size = 0x8, scoped, tag = 'scoped memory for tpu_custom_call.1']
    %14 = vsyncpa [#allocation4], 0
    %s15 = scalar_lea.sflag [#allocation4], 1
    %16 = vsyncpa %s15, 0
    loop: start=0, step=1, limit=5
    $region2: #{tpu_custom_call.1} parent=1 // loop_pre_header
      _
    $region3: #{tpu_custom_call.1} parent=1 // loop_header
      %s18 = sphi 0, %s22
      %p19 = scmp.ge.s32.totalorder %s18, 5
      %s28 = sphi 0, %s30
      %s31 = sphi 0, %s28
      %s32 = sphi 0, %s31
      %s48 = sphi 0, %s32
      %s52 = sphi 0, %s52
      %s54 = sphi 0, %s52
      %s55 = sphi 0, %s54
      %s69 = sphi 0, %s55
      %s73 = sphi 0, %s73
      %s75 = sphi 0, %s73
      %s76 = sphi 0, %s75
      %s90 = sphi 0, %s76
      %s94 = sphi 0, %s94
      %s96 = sphi 0, %s94
      %s97 = sphi 0, %s96
      %s111 = sphi 0, %s97
      %s115 = sphi 0, %s115
      %s117 = sphi 0, %s115
      %s118 = sphi 0, %s117
      %s132 = sphi 0, %s118
      %s136 = sphi 0, %s136
      %s138 = sphi 0, %s136
      %s139 = sphi 0, %s138
      %s153 = sphi 0, %s139
      %s157 = sphi 0, %s157
      %s159 = sphi 0, %s157
      %s160 = sphi 0, %s159
      %s174 = sphi 0, %s160
      %s180 = sphi 0, %s182
      %s183 = sphi 0, %s180
      %s184 = sphi 0, %s183
      %s200 = sphi 0, %s184
    $region4: #{tpu_custom_call.1} parent=1 // loop_header_branch
      %21 = sbr.rel (%p19) target = $region8
    $region5: #{tpu_custom_call.1} parent=1 // loop_body
      %s23 = ssub.s32 %s18, 1
      %s24 = ssub.s32 %s18, 2
      %s25 = sadd.s32 %s18, 1
      %s26 = ssub.s32 %s18, %s25
      %p27 = scmp.eq.s32.totalorder %s26, 0
      %s29 = sadd.s32 %s28, 1
      %s30 = scalar_select %p27, %s28, %s29
      %p33 = pneg %p27
      %p34 = scmp.eq.s32.totalorder %s18, 2
      %p35 = por %p33, %p34
      %p36 = scmp.ne.s32.totalorder %s28, %s31
      %p37 = scmp.eq.s32.totalorder %s18, 0
      %p38 = por %p36, %p37
      %p39 = scmp.ne.s32.totalorder %s28, %s31
      %p40 = scmp.eq.s32.totalorder %s23, 2
      %p41 = por %p39, %p40
      %p42 = scmp.ne.s32.totalorder %s31, %s32
      %p43 = scmp.eq.s32.totalorder %s23, 0
      %p44 = por %p42, %p43
      %p45 = scmp.ne.s32.totalorder %s31, %s32
      %p46 = scmp.eq.s32.totalorder %s24, 2
      %p47 = por %p45, %p46
      %p49 = scmp.ne.s32.totalorder %s32, %s48
      %p50 = scmp.eq.s32.totalorder %s24, 0
      %p51 = por %p49, %p50
      %s53 = sadd.s32 %s52, 1
      %p56 = scmp.eq.s32.totalorder %s18, 2
      %p57 = scmp.ne.s32.totalorder %s52, %s54
      %p58 = scmp.eq.s32.totalorder %s18, 0
      %p59 = por %p57, %p58
      %p60 = scmp.ne.s32.totalorder %s52, %s54
      %p61 = scmp.eq.s32.totalorder %s23, 2
      %p62 = por %p60, %p61
      %p63 = scmp.ne.s32.totalorder %s54, %s55
      %p64 = scmp.eq.s32.totalorder %s23, 0
      %p65 = por %p63, %p64
      %p66 = scmp.ne.s32.totalorder %s54, %s55
      %p67 = scmp.eq.s32.totalorder %s24, 2
      %p68 = por %p66, %p67
      %p70 = scmp.ne.s32.totalorder %s55, %s69
      %p71 = scmp.eq.s32.totalorder %s24, 0
      %p72 = por %p70, %p71
      %s74 = sadd.s32 %s73, 1
      %p77 = scmp.eq.s32.totalorder %s18, 2
      %p78 = scmp.ne.s32.totalorder %s73, %s75
      %p79 = scmp.eq.s32.totalorder %s18, 0
      %p80 = por %p78, %p79
      %p81 = scmp.ne.s32.totalorder %s73, %s75
      %p82 = scmp.eq.s32.totalorder %s23, 2
      %p83 = por %p81, %p82
      %p84 = scmp.ne.s32.totalorder %s75, %s76
      %p85 = scmp.eq.s32.totalorder %s23, 0
      %p86 = por %p84, %p85
      %p87 = scmp.ne.s32.totalorder %s75, %s76
      %p88 = scmp.eq.s32.totalorder %s24, 2
      %p89 = por %p87, %p88
      %p91 = scmp.ne.s32.totalorder %s76, %s90
      %p92 = scmp.eq.s32.totalorder %s24, 0
      %p93 = por %p91, %p92
      %s95 = sadd.s32 %s94, 1
      %p98 = scmp.eq.s32.totalorder %s18, 2
      %p99 = scmp.ne.s32.totalorder %s94, %s96
      %p100 = scmp.eq.s32.totalorder %s18, 0
      %p101 = por %p99, %p100
      %p102 = scmp.ne.s32.totalorder %s94, %s96
      %p103 = scmp.eq.s32.totalorder %s23, 2
      %p104 = por %p102, %p103
      %p105 = scmp.ne.s32.totalorder %s96, %s97
      %p106 = scmp.eq.s32.totalorder %s23, 0
      %p107 = por %p105, %p106
      %p108 = scmp.ne.s32.totalorder %s96, %s97
      %p109 = scmp.eq.s32.totalorder %s24, 2
      %p110 = por %p108, %p109
      %p112 = scmp.ne.s32.totalorder %s97, %s111
      %p113 = scmp.eq.s32.totalorder %s24, 0
      %p114 = por %p112, %p113
      %s116 = sadd.s32 %s115, 1
      %p119 = scmp.eq.s32.totalorder %s18, 2
      %p120 = scmp.ne.s32.totalorder %s115, %s117
      %p121 = scmp.eq.s32.totalorder %s18, 0
      %p122 = por %p120, %p121
      %p123 = scmp.ne.s32.totalorder %s115, %s117
      %p124 = scmp.eq.s32.totalorder %s23, 2
      %p125 = por %p123, %p124
      %p126 = scmp.ne.s32.totalorder %s117, %s118
      %p127 = scmp.eq.s32.totalorder %s23, 0
      %p128 = por %p126, %p127
      %p129 = scmp.ne.s32.totalorder %s117, %s118
      %p130 = scmp.eq.s32.totalorder %s24, 2
      %p131 = por %p129, %p130
      %p133 = scmp.ne.s32.totalorder %s118, %s132
      %p134 = scmp.eq.s32.totalorder %s24, 0
      %p135 = por %p133, %p134
      %s137 = sadd.s32 %s136, 1
      %p140 = scmp.eq.s32.totalorder %s18, 2
      %p141 = scmp.ne.s32.totalorder %s136, %s138
      %p142 = scmp.eq.s32.totalorder %s18, 0
      %p143 = por %p141, %p142
      %p144 = scmp.ne.s32.totalorder %s136, %s138
      %p145 = scmp.eq.s32.totalorder %s23, 2
      %p146 = por %p144, %p145
      %p147 = scmp.ne.s32.totalorder %s138, %s139
      %p148 = scmp.eq.s32.totalorder %s23, 0
      %p149 = por %p147, %p148
      %p150 = scmp.ne.s32.totalorder %s138, %s139
      %p151 = scmp.eq.s32.totalorder %s24, 2
      %p152 = por %p150, %p151
      %p154 = scmp.ne.s32.totalorder %s139, %s153
      %p155 = scmp.eq.s32.totalorder %s24, 0
      %p156 = por %p154, %p155
      %s158 = sadd.s32 %s157, 1
      %p161 = scmp.eq.s32.totalorder %s18, 2
      %p162 = scmp.ne.s32.totalorder %s157, %s159
      %p163 = scmp.eq.s32.totalorder %s18, 0
      %p164 = por %p162, %p163
      %p165 = scmp.ne.s32.totalorder %s157, %s159
      %p166 = scmp.eq.s32.totalorder %s23, 2
      %p167 = por %p165, %p166
      %p168 = scmp.ne.s32.totalorder %s159, %s160
      %p169 = scmp.eq.s32.totalorder %s23, 0
      %p170 = por %p168, %p169
      %p171 = scmp.ne.s32.totalorder %s159, %s160
      %p172 = scmp.eq.s32.totalorder %s24, 2
      %p173 = por %p171, %p172
      %p175 = scmp.ne.s32.totalorder %s160, %s174
      %p176 = scmp.eq.s32.totalorder %s24, 0
      %p177 = por %p175, %p176
      %s178 = ssub.s32 %s18, %s25
      %p179 = scmp.eq.s32.totalorder %s178, 0
      %s181 = sadd.s32 %s180, 1
      %s182 = scalar_select %p179, %s180, %s181
      %p185 = pneg %p179
      %p186 = scmp.eq.s32.totalorder %s18, 2
      %p187 = por %p185, %p186
      %p188 = scmp.ne.s32.totalorder %s180, %s183
      %p189 = scmp.eq.s32.totalorder %s18, 0
      %p190 = por %p188, %p189
      %p191 = scmp.ne.s32.totalorder %s180, %s183
      %p192 = scmp.eq.s32.totalorder %s23, 2
      %p193 = por %p191, %p192
      %p194 = scmp.ne.s32.totalorder %s183, %s184
      %p195 = scmp.eq.s32.totalorder %s23, 0
      %p196 = por %p194, %p195
      %p197 = scmp.ne.s32.totalorder %s183, %s184
      %p198 = scmp.eq.s32.totalorder %s24, 2
      %p199 = por %p197, %p198
      %p201 = scmp.ne.s32.totalorder %s184, %s200
      %p202 = scmp.eq.s32.totalorder %s24, 0
      %p203 = por %p201, %p202
      %p204 = scmp.le.s32.totalorder 1, %s18
      %p205 = scmp.lt.s32.totalorder %s18, 4
      %p206 = pnand %p204, %p205
      %p207 = pneg %p206
      // Predicated region
      $region9: #{tpu_custom_call.1} parent=5 // pred_check
        _
      $region10: #{tpu_custom_call.1} parent=5 // pred_check_branch
        %209 = sbr.rel (%p206) target = $region12
      $region11: #{tpu_custom_call.1} parent=5 // pred_region
        %s210 = ssub.s32 %s18, 1
        // Predicated region
        $region13: #{tpu_custom_call.1} parent=11 // pred_check
          %p211 = pneg %p65
        $region14: #{tpu_custom_call.1} parent=11 // pred_check_branch
          %213 = sbr.rel (%p211) target = $region16
        $region15: #{tpu_custom_call.1} parent=11 // pred_region
          _
        $region16: #{tpu_custom_call.1} parent=11 // pred_fallthru
          _
        // Predicated region
        $region17: #{tpu_custom_call.1} parent=11 // pred_check
          %p214 = pneg %p86
        $region18: #{tpu_custom_call.1} parent=11 // pred_check_branch
          %216 = sbr.rel (%p214) target = $region20
        $region19: #{tpu_custom_call.1} parent=11 // pred_region
          _
        $region20: #{tpu_custom_call.1} parent=11 // pred_fallthru
          _
        // Predicated region
        $region21: #{tpu_custom_call.1} parent=11 // pred_check
          %p217 = pneg %p107
        $region22: #{tpu_custom_call.1} parent=11 // pred_check_branch
          %219 = sbr.rel (%p217) target = $region24
        $region23: #{tpu_custom_call.1} parent=11 // pred_region
          _
        $region24: #{tpu_custom_call.1} parent=11 // pred_fallthru
          _
        // Predicated region
        $region25: #{tpu_custom_call.1} parent=11 // pred_check
          %p220 = pneg %p128
        $region26: #{tpu_custom_call.1} parent=11 // pred_check_branch
          %222 = sbr.rel (%p220) target = $region28
        $region27: #{tpu_custom_call.1} parent=11 // pred_region
          _
        $region28: #{tpu_custom_call.1} parent=11 // pred_fallthru
          _
        // Predicated region
        $region29: #{tpu_custom_call.1} parent=11 // pred_check
          %p223 = pneg %p149
        $region30: #{tpu_custom_call.1} parent=11 // pred_check_branch
          %225 = sbr.rel (%p223) target = $region32
        $region31: #{tpu_custom_call.1} parent=11 // pred_region
          _
        $region32: #{tpu_custom_call.1} parent=11 // pred_fallthru
          _
        // Predicated region
        $region33: #{tpu_custom_call.1} parent=11 // pred_check
          %p226 = pneg %p170
        $region34: #{tpu_custom_call.1} parent=11 // pred_check_branch
          %228 = sbr.rel (%p226) target = $region36
        $region35: #{tpu_custom_call.1} parent=11 // pred_region
          _
        $region36: #{tpu_custom_call.1} parent=11 // pred_fallthru
          _
      $region12: #{tpu_custom_call.1} parent=5 // pred_fallthru
        _
      %p229 = scmp.lt.s32.totalorder %s18, 3
      // Predicated region
      $region37: #{tpu_custom_call.1} parent=5 // pred_check
        %p230 = pneg %p229
      $region38: #{tpu_custom_call.1} parent=5 // pred_check_branch
        %232 = sbr.rel (%p230) target = $region40
      $region39: #{tpu_custom_call.1} parent=5 // pred_region
        // Predicated region
        $region41: #{tpu_custom_call.1} parent=39 // pred_check
          %p233 = pneg %p38
        $region42: #{tpu_custom_call.1} parent=39 // pred_check_branch
          %235 = sbr.rel (%p233) target = $region44
        $region43: #{tpu_custom_call.1} parent=39 // pred_region
          %s236 = smul.u32 32, %s18
          %p237 = scmp.lt.s32.totalorder %s236, 95
          %s238 = scalar_select %p237, %s236, 95
          %s239 = smul.addr %s238, 8
          %s240 = scalar_lea.vmem %s0, %s239
          %s241 = smul.u32 32, %s18
        $region44: #{tpu_custom_call.1} parent=39 // pred_fallthru
          _
      $region40: #{tpu_custom_call.1} parent=5 // pred_fallthru
        _
      %p242 = scmp.le.s32.totalorder 1, %s18
      %p243 = scmp.lt.s32.totalorder %s18, 4
      %p244 = pnand %p242, %p243
      %p245 = pneg %p244
      // Predicated region
      $region45: #{tpu_custom_call.1} parent=5 // pred_check
        _
      $region46: #{tpu_custom_call.1} parent=5 // pred_check_branch
        %247 = sbr.rel (%p244) target = $region48
      $region47: #{tpu_custom_call.1} parent=5 // pred_region
        %s248 = ssub.s32 %s18, 1
        %s249 = smul.u32 32, %s23
        %p250 = scmp.lt.s32.totalorder %s249, 95
        %s251 = scalar_select %p250, %s249, 95
        %s252 = smul.addr %s251, 8
        %s253 = scalar_lea.vmem %s0, %s252
        %p254 = pneg %p44
        %p255 = pneg %p41
        %p256 = pneg %p65
        %p257 = pneg %p62
        %p258 = pneg %p86
        %p259 = pneg %p83
        %p260 = pneg %p107
        %p261 = pneg %p104
        %p262 = pneg %p128
        %p263 = pneg %p125
        %p264 = pneg %p149
        %p265 = pneg %p146
        %p266 = pneg %p170
        %p267 = pneg %p167
        %p268 = pneg %p196
        %p269 = pneg %p193
        %s270 = sand.u32 %s183, 1
        %s271 = scalar_lea.sflag [#allocation4], %s270
        %s272 = sand.u32 %s183, 1
        %s273 = smul.addr %s272, 2
        %s274 = scalar_lea.vmem [#allocation3], %s273
        %s275 = smul.u32 32, %s23
        %p276 = scmp.lt.s32.totalorder %s275, 95
        %s277 = scalar_select %p276, %s275, 95
        %s278 = smul.addr %s277, 8
        %s279 = scalar_lea.vmem %s0, %s278
        %s280 = smul.u32 32, %s23
        %s281 = smul.u32 2, %s23
        %v282 = vld [vmem:[%s279] sm:$0xff]
        %v283 = vld [vmem:[%s279 + $0x8] sm:$0xff]
        %v284 = vld [vmem:[%s279 + $0x10] sm:$0xff]
        %v285 = vld [vmem:[%s279 + $0x18] sm:$0xff]
        %v286 = vld [vmem:[%s279 + $0x20] sm:$0xff]
        %v287 = vld [vmem:[%s279 + $0x28] sm:$0xff]
        %v288 = vld [vmem:[%s279 + $0x30] sm:$0xff]
        %v289 = vld [vmem:[%s279 + $0x38] sm:$0xff]
        %v290 = vld [vmem:[%s279 + $0x40] sm:$0xff]
        %v291 = vld [vmem:[%s279 + $0x48] sm:$0xff]
        %v292 = vld [vmem:[%s279 + $0x50] sm:$0xff]
        %v293 = vld [vmem:[%s279 + $0x58] sm:$0xff]
        %v294 = vld [vmem:[%s279 + $0x60] sm:$0xff]
        %v295 = vld [vmem:[%s279 + $0x68] sm:$0xff]
        %v296 = vld [vmem:[%s279 + $0x70] sm:$0xff]
        %v297 = vld [vmem:[%s279 + $0x78] sm:$0xff]
        %v298 = vld [vmem:[%s279 + $0x80] sm:$0xff]
        %v299 = vld [vmem:[%s279 + $0x88] sm:$0xff]
        %v300 = vld [vmem:[%s279 + $0x90] sm:$0xff]
        %v301 = vld [vmem:[%s279 + $0x98] sm:$0xff]
        %v302 = vld [vmem:[%s279 + $0xa0] sm:$0xff]
        %v303 = vld [vmem:[%s279 + $0xa8] sm:$0xff]
        %v304 = vld [vmem:[%s279 + $0xb0] sm:$0xff]
        %v305 = vld [vmem:[%s279 + $0xb8] sm:$0xff]
        %v306 = vld [vmem:[%s279 + $0xc0] sm:$0xff]
        %v307 = vld [vmem:[%s279 + $0xc8] sm:$0xff]
        %v308 = vld [vmem:[%s279 + $0xd0] sm:$0xff]
        %v309 = vld [vmem:[%s279 + $0xd8] sm:$0xff]
        %v310 = vld [vmem:[%s279 + $0xe0] sm:$0xff]
        %v311 = vld [vmem:[%s279 + $0xe8] sm:$0xff]
        %v312 = vld [vmem:[%s279 + $0xf0] sm:$0xff]
        %v313 = vld [vmem:[%s279 + $0xf8] sm:$0xff]
        %v314 = vld [vmem:[%s1] sm:$0xff]
        %v315 = vld [vmem:[%s1 + $0x8] sm:$0xff]
        %v316 = vld [vmem:[%s1 + $0x10] sm:$0xff]
        %v317 = vld [vmem:[%s1 + $0x18] sm:$0xff]
        %v318 = vld [vmem:[%s1 + $0x20] sm:$0xff]
        %v319 = vld [vmem:[%s1 + $0x28] sm:$0xff]
        %v320 = vld [vmem:[%s1 + $0x30] sm:$0xff]
        %v321 = vld [vmem:[%s1 + $0x38] sm:$0xff]
        %v322 = vld [vmem:[%s2] sm:$0xff]
        %v323 = vld [vmem:[%s2 + $0x8] sm:$0xff]
        %v324 = vld [vmem:[%s2 + $0x10] sm:$0xff]
        %v325 = vld [vmem:[%s2 + $0x18] sm:$0xff]
        %v326 = vld [vmem:[%s2 + $0x20] sm:$0xff]
        %v327 = vld [vmem:[%s2 + $0x28] sm:$0xff]
        %v328 = vld [vmem:[%s2 + $0x30] sm:$0xff]
        %v329 = vld [vmem:[%s2 + $0x38] sm:$0xff]
        %331 = vset.pattern.permute.xlu0 0
        %332 = vperm.xlu0 %331, %v322
        %v333 = vpop.permute.xlu0 %332
        %336 = vset.pattern.permute.xlu0 0
        %337 = vperm.xlu0 %336, %v323
        %v338 = vpop.permute.xlu0 %337
        %341 = vset.pattern.permute.xlu0 0
        %342 = vperm.xlu0 %341, %v324
        %v343 = vpop.permute.xlu0 %342
        %346 = vset.pattern.permute.xlu0 0
        %347 = vperm.xlu0 %346, %v325
        %v348 = vpop.permute.xlu0 %347
        %351 = vset.pattern.permute.xlu0 0
        %352 = vperm.xlu0 %351, %v326
        %v353 = vpop.permute.xlu0 %352
        %356 = vset.pattern.permute.xlu0 0
        %357 = vperm.xlu0 %356, %v327
        %v358 = vpop.permute.xlu0 %357
        %361 = vset.pattern.permute.xlu0 0
        %362 = vperm.xlu0 %361, %v328
        %v363 = vpop.permute.xlu0 %362
        %366 = vset.pattern.permute.xlu0 0
        %367 = vperm.xlu0 %366, %v329
        %v368 = vpop.permute.xlu0 %367
        %vm370 = vcmask 343040
        %v372 = vsel %vm370, %v314, 0
        %v375 = vsel %vm370, %v315, 0
        %v378 = vsel %vm370, %v316, 0
        %v381 = vsel %vm370, %v317, 0
        %v384 = vsel %vm370, %v318, 0
        %v387 = vsel %vm370, %v319, 0
        %v390 = vsel %vm370, %v320, 0
        %v393 = vsel %vm370, %v321, 0
        %v396 = vsel %vm370, %v282, 0
        %v399 = vsel %vm370, %v283, 0
        %v402 = vsel %vm370, %v284, 0
        %v405 = vsel %vm370, %v285, 0
        %v408 = vsel %vm370, %v286, 0
        %v411 = vsel %vm370, %v287, 0
        %v414 = vsel %vm370, %v288, 0
        %v417 = vsel %vm370, %v289, 0
        %v420 = vsel %vm370, %v290, 0
        %v423 = vsel %vm370, %v291, 0
        %v426 = vsel %vm370, %v292, 0
        %v429 = vsel %vm370, %v293, 0
        %v432 = vsel %vm370, %v294, 0
        %v435 = vsel %vm370, %v295, 0
        %v438 = vsel %vm370, %v296, 0
        %v441 = vsel %vm370, %v297, 0
        %v444 = vsel %vm370, %v298, 0
        %v447 = vsel %vm370, %v299, 0
        %v450 = vsel %vm370, %v300, 0
        %v453 = vsel %vm370, %v301, 0
        %v456 = vsel %vm370, %v302, 0
        %v459 = vsel %vm370, %v303, 0
        %v462 = vsel %vm370, %v304, 0
        %v465 = vsel %vm370, %v305, 0
        %v468 = vsel %vm370, %v306, 0
        %v471 = vsel %vm370, %v307, 0
        %v474 = vsel %vm370, %v308, 0
        %v477 = vsel %vm370, %v309, 0
        %v480 = vsel %vm370, %v310, 0
        %v483 = vsel %vm370, %v311, 0
        %v486 = vsel %vm370, %v312, 0
        %v489 = vsel %vm370, %v313, 0
        %491 = vmatprep.subr.mxu0 0.0
        %492 = vmatpush1.xpose.msra.mxu0 %v441
        %493 = vmatprep.subr.mxu0 0.0
        %494 = vmatpush1.xpose.msra.mxu0 %v438
        %495 = vmatprep.subr.mxu0 0.0
        %496 = vmatpush1.xpose.msra.mxu0 %v435
        %497 = vmatprep.subr.mxu0 0.0
        %498 = vmatpush1.xpose.msra.mxu0 %v432
        %499 = vmatprep.subr.mxu0 0.0
        %500 = vmatpush1.xpose.msra.mxu0 %v429
        %501 = vmatprep.subr.mxu0 0.0
        %502 = vmatpush1.xpose.msra.mxu0 %v426
        %503 = vmatprep.subr.mxu0 0.0
        %504 = vmatpush1.xpose.msra.mxu0 %v423
        %505 = vmatprep.subr.mxu0 0.0
        %506 = vmatpush1.xpose.msra.mxu0 %v420
        %507 = vmatprep.subr.mxu0 0.0
        %508 = vmatpush1.xpose.msra.mxu0 %v417
        %509 = vmatprep.subr.mxu0 0.0
        %510 = vmatpush1.xpose.msra.mxu0 %v414
        %511 = vmatprep.subr.mxu0 0.0
        %512 = vmatpush1.xpose.msra.mxu0 %v411
        %513 = vmatprep.subr.mxu0 0.0
        %514 = vmatpush1.xpose.msra.mxu0 %v408
        %515 = vmatprep.subr.mxu0 0.0
        %516 = vmatpush1.xpose.msra.mxu0 %v405
        %517 = vmatprep.subr.mxu0 0.0
        %518 = vmatpush1.xpose.msra.mxu0 %v402
        %519 = vmatprep.subr.mxu0 0.0
        %520 = vmatpush1.xpose.msra.mxu0 %v399
        %521 = vmatprep.subr.mxu0 0.0
        %522 = vmatpush1.xpose.msra.mxu0 %v396
        %523 = vmatprep.subr.mxu0 0.0
        %524 = vmatpush2.xpose.msra.mxu0 %v489
        %525 = vmatprep.subr.mxu0 0.0
        %526 = vmatpush2.xpose.msra.mxu0 %v486
        %527 = vmatprep.subr.mxu0 0.0
        %528 = vmatpush2.xpose.msra.mxu0 %v483
        %529 = vmatprep.subr.mxu0 0.0
        %530 = vmatpush2.xpose.msra.mxu0 %v480
        %531 = vmatprep.subr.mxu0 0.0
        %532 = vmatpush2.xpose.msra.mxu0 %v477
        %533 = vmatprep.subr.mxu0 0.0
        %534 = vmatpush2.xpose.msra.mxu0 %v474
        %535 = vmatprep.subr.mxu0 0.0
        %536 = vmatpush2.xpose.msra.mxu0 %v471
        %537 = vmatprep.subr.mxu0 0.0
        %538 = vmatpush2.xpose.msra.mxu0 %v468
        %539 = vmatprep.subr.mxu0 0.0
        %540 = vmatpush2.xpose.msra.mxu0 %v465
        %541 = vmatprep.subr.mxu0 0.0
        %542 = vmatpush2.xpose.msra.mxu0 %v462
        %543 = vmatprep.subr.mxu0 0.0
        %544 = vmatpush2.xpose.msra.mxu0 %v459
        %545 = vmatprep.subr.mxu0 0.0
        %546 = vmatpush2.xpose.msra.mxu0 %v456
        %547 = vmatprep.subr.mxu0 0.0
        %548 = vmatpush2.xpose.msra.mxu0 %v453
        %549 = vmatprep.subr.mxu0 0.0
        %550 = vmatpush2.xpose.msra.mxu0 %v450
        %551 = vmatprep.subr.mxu0 0.0
        %552 = vmatpush2.xpose.msra.mxu0 %v447
        %553 = vmatprep.subr.mxu0 0.0
        %554 = vmatpush2.xpose.msra.mxu0 %v444
        %555 = vmatprep.mubr.f32.mxu0 0.0
        %556 = vmatmul.mubr.f32.gmra.mxu0 %v372
        %v557 = vpop.f32.mrf.mxu0
        %v558 = vadd.f32 %v333, %v557
        %v559 = vpop.f32.mrf.mxu0
        %v560 = vadd.f32 %v333, %v559
        %561 = vmatprep.mubr.f32.mxu0 0.0
        %562 = vmatmul.mubr.f32.gmra.mxu0 %v375
        %v563 = vpop.f32.mrf.mxu0
        %v564 = vadd.f32 %v338, %v563
        %v565 = vpop.f32.mrf.mxu0
        %v566 = vadd.f32 %v338, %v565
        %567 = vmatprep.mubr.f32.mxu0 0.0
        %568 = vmatmul.mubr.f32.gmra.mxu0 %v378
        %v569 = vpop.f32.mrf.mxu0
        %v570 = vadd.f32 %v343, %v569
        %v571 = vpop.f32.mrf.mxu0
        %v572 = vadd.f32 %v343, %v571
        %573 = vmatprep.mubr.f32.mxu0 0.0
        %574 = vmatmul.mubr.f32.gmra.mxu0 %v381
        %v575 = vpop.f32.mrf.mxu0
        %v576 = vadd.f32 %v348, %v575
        %v577 = vpop.f32.mrf.mxu0
        %v578 = vadd.f32 %v348, %v577
        %579 = vmatprep.mubr.f32.mxu0 0.0
        %580 = vmatmul.mubr.f32.gmra.mxu0 %v384
        %v581 = vpop.f32.mrf.mxu0
        %v582 = vadd.f32 %v353, %v581
        %v583 = vpop.f32.mrf.mxu0
        %v584 = vadd.f32 %v353, %v583
        %585 = vmatprep.mubr.f32.mxu0 0.0
        %586 = vmatmul.mubr.f32.gmra.mxu0 %v387
        %v587 = vpop.f32.mrf.mxu0
        %v588 = vadd.f32 %v358, %v587
        %v589 = vpop.f32.mrf.mxu0
        %v590 = vadd.f32 %v358, %v589
        %591 = vmatprep.mubr.f32.mxu0 0.0
        %592 = vmatmul.mubr.f32.gmra.mxu0 %v390
        %v593 = vpop.f32.mrf.mxu0
        %v594 = vadd.f32 %v363, %v593
        %v595 = vpop.f32.mrf.mxu0
        %v596 = vadd.f32 %v363, %v595
        %597 = vmatprep.mubr.f32.mxu0 0.0
        %598 = vmatmul.mubr.f32.gmra.mxu0 %v393
        %v599 = vpop.f32.mrf.mxu0
        %v600 = vadd.f32 %v368, %v599
        %v601 = vpop.f32.mrf.mxu0
        %v602 = vadd.f32 %v368, %v601
        %603 = vdwg.mxu0
        %v604 = vmax.f32 %v558, 0.0
        %v605 = vmax.f32 %v560, 0.0
        %v606 = vmax.f32 %v564, 0.0
        %v607 = vmax.f32 %v566, 0.0
        %v608 = vmax.f32 %v570, 0.0
        %v609 = vmax.f32 %v572, 0.0
        %v610 = vmax.f32 %v576, 0.0
        %v611 = vmax.f32 %v578, 0.0
        %v612 = vmax.f32 %v582, 0.0
        %v613 = vmax.f32 %v584, 0.0
        %v614 = vmax.f32 %v588, 0.0
        %v615 = vmax.f32 %v590, 0.0
        %v616 = vmax.f32 %v594, 0.0
        %v617 = vmax.f32 %v596, 0.0
        %v618 = vmax.f32 %v600, 0.0
        %v619 = vmax.f32 %v602, 0.0
        %v620 = vld [vmem:[%s3] sm:$0xff]
        %v621 = vld [vmem:[%s3 + $0x8] sm:$0xff]
        %v622 = vld [vmem:[%s3 + $0x10] sm:$0xff]
        %v623 = vld [vmem:[%s3 + $0x18] sm:$0xff]
        %v624 = vld [vmem:[%s4] sm:$0xff]
        %v625 = vld [vmem:[%s4 + $0x8] sm:$0xff]
        %v626 = vld [vmem:[%s4 + $0x10] sm:$0xff]
        %v627 = vld [vmem:[%s4 + $0x18] sm:$0xff]
        %629 = vset.pattern.permute.xlu0 0
        %630 = vperm.xlu0 %629, %v624
        %v631 = vpop.permute.xlu0 %630
        %634 = vset.pattern.permute.xlu0 0
        %635 = vperm.xlu0 %634, %v625
        %v636 = vpop.permute.xlu0 %635
        %639 = vset.pattern.permute.xlu0 0
        %640 = vperm.xlu0 %639, %v626
        %v641 = vpop.permute.xlu0 %640
        %644 = vset.pattern.permute.xlu0 0
        %645 = vperm.xlu0 %644, %v627
        %v646 = vpop.permute.xlu0 %645
        %vm648 = vcmask 523264
        %v650 = vsel %vm648, %v620, 0
        %v653 = vsel %vm648, %v621, 0
        %v656 = vsel %vm648, %v622, 0
        %v659 = vsel %vm648, %v623, 0
        %661 = vmatprep.subr.mxu0 0.0
        %662 = vmatpush1.msra.mxu0 0.0
        %663 = vmatprep.subr.mxu0 0.0
        %664 = vmatpush1.msra.mxu0 0.0
        %665 = vmatprep.subr.mxu0 0.0
        %666 = vmatpush1.msra.mxu0 0.0
        %667 = vmatprep.subr.mxu0 0.0
        %668 = vmatpush1.msra.mxu0 0.0
        %669 = vmatprep.subr.mxu0 0.0
        %670 = vmatpush1.msra.mxu0 0.0
        %671 = vmatprep.subr.mxu0 0.0
        %672 = vmatpush1.msra.mxu0 0.0
        %673 = vmatprep.subr.mxu0 0.0
        %674 = vmatpush1.msra.mxu0 0.0
        %675 = vmatprep.subr.mxu0 0.0
        %676 = vmatpush1.msra.mxu0 0.0
        %677 = vmatprep.subr.mxu0 %v619
        %678 = vmatpush1.msra.mxu0 %v618
        %679 = vmatprep.subr.mxu0 %v617
        %680 = vmatpush1.msra.mxu0 %v616
        %681 = vmatprep.subr.mxu0 %v615
        %682 = vmatpush1.msra.mxu0 %v614
        %683 = vmatprep.subr.mxu0 %v613
        %684 = vmatpush1.msra.mxu0 %v612
        %685 = vmatprep.subr.mxu0 %v611
        %686 = vmatpush1.msra.mxu0 %v610
        %687 = vmatprep.subr.mxu0 %v609
        %688 = vmatpush1.msra.mxu0 %v608
        %689 = vmatprep.subr.mxu0 %v607
        %690 = vmatpush1.msra.mxu0 %v606
        %691 = vmatprep.subr.mxu0 %v605
        %692 = vmatpush1.msra.mxu0 %v604
        %693 = vmatprep.subr.mxu0 0.0
        %694 = vmatpush2.msra.mxu0 0.0
        %695 = vmatprep.subr.mxu0 0.0
        %696 = vmatpush2.msra.mxu0 0.0
        %697 = vmatprep.subr.mxu0 0.0
        %698 = vmatpush2.msra.mxu0 0.0
        %699 = vmatprep.subr.mxu0 0.0
        %700 = vmatpush2.msra.mxu0 0.0
        %701 = vmatprep.subr.mxu0 0.0
        %702 = vmatpush2.msra.mxu0 0.0
        %703 = vmatprep.subr.mxu0 0.0
        %704 = vmatpush2.msra.mxu0 0.0
        %705 = vmatprep.subr.mxu0 0.0
        %706 = vmatpush2.msra.mxu0 0.0
        %707 = vmatprep.subr.mxu0 0.0
        %708 = vmatpush2.msra.mxu0 0.0
        %709 = vmatprep.subr.mxu0 0.0
        %710 = vmatpush2.msra.mxu0 0.0
        %711 = vmatprep.subr.mxu0 0.0
        %712 = vmatpush2.msra.mxu0 0.0
        %713 = vmatprep.subr.mxu0 0.0
        %714 = vmatpush2.msra.mxu0 0.0
        %715 = vmatprep.subr.mxu0 0.0
        %716 = vmatpush2.msra.mxu0 0.0
        %717 = vmatprep.subr.mxu0 0.0
        %718 = vmatpush2.msra.mxu0 0.0
        %719 = vmatprep.subr.mxu0 0.0
        %720 = vmatpush2.msra.mxu0 0.0
        %721 = vmatprep.subr.mxu0 0.0
        %722 = vmatpush2.msra.mxu0 0.0
        %723 = vmatprep.subr.mxu0 0.0
        %724 = vmatpush2.msra.mxu0 0.0
        %725 = vmatprep.mubr.f32.mxu0 0.0
        %726 = vmatmul.mubr.f32.gmra.mxu0 %v650
        %v727 = vpop.f32.mrf.mxu0
        %v728 = vadd.f32 %v631, %v727
        %v729 = vpop.f32.mrf.mxu0
        %v730 = vadd.f32 %v631, %v729
        %731 = vmatprep.mubr.f32.mxu0 0.0
        %732 = vmatmul.mubr.f32.gmra.mxu0 %v653
        %v733 = vpop.f32.mrf.mxu0
        %v734 = vadd.f32 %v636, %v733
        %v735 = vpop.f32.mrf.mxu0
        %v736 = vadd.f32 %v636, %v735
        %737 = vmatprep.mubr.f32.mxu0 0.0
        %738 = vmatmul.mubr.f32.gmra.mxu0 %v656
        %v739 = vpop.f32.mrf.mxu0
        %v740 = vadd.f32 %v641, %v739
        %v741 = vpop.f32.mrf.mxu0
        %v742 = vadd.f32 %v641, %v741
        %743 = vmatprep.mubr.f32.mxu0 0.0
        %744 = vmatmul.mubr.f32.gmra.mxu0 %v659
        %v745 = vpop.f32.mrf.mxu0
        %v746 = vadd.f32 %v646, %v745
        %v747 = vpop.f32.mrf.mxu0
        %v748 = vadd.f32 %v646, %v747
        %749 = vdwg.mxu0
        %v750 = vmax.f32 %v728, 0.0
        %v751 = vmax.f32 %v730, 0.0
        %v752 = vmax.f32 %v734, 0.0
        %v753 = vmax.f32 %v736, 0.0
        %v754 = vmax.f32 %v740, 0.0
        %v755 = vmax.f32 %v742, 0.0
        %v756 = vmax.f32 %v746, 0.0
        %v757 = vmax.f32 %v748, 0.0
        %v758 = vld [vmem:[%s5] sm:$0x1]
        %v759 = vld [vmem:[#allocation2] sm:$0x1]
        %761 = vset.pattern.permute.xlu0 0
        %762 = vperm.xlu0 %761, %v759
        %v763 = vpop.permute.xlu0 %762
        %v765 = vlaneseq
        %v766 = vshrl.u32 %v765, 7
        %v767 = vsub.s32 0, %v766
        %v768 = vrot.slane %v763, %v767
        %vm769 = vcmask 261120
        %v771 = vsel %vm769, %v758, 0
        %773 = vmatprep.subr.mxu0 0.0
        %774 = vmatpush1.msra.mxu0 0.0
        %775 = vmatprep.subr.mxu0 0.0
        %776 = vmatpush1.msra.mxu0 0.0
        %777 = vmatprep.subr.mxu0 0.0
        %778 = vmatpush1.msra.mxu0 0.0
        %779 = vmatprep.subr.mxu0 0.0
        %780 = vmatpush1.msra.mxu0 0.0
        %781 = vmatprep.subr.mxu0 0.0
        %782 = vmatpush1.msra.mxu0 0.0
        %783 = vmatprep.subr.mxu0 0.0
        %784 = vmatpush1.msra.mxu0 0.0
        %785 = vmatprep.subr.mxu0 0.0
        %786 = vmatpush1.msra.mxu0 0.0
        %787 = vmatprep.subr.mxu0 0.0
        %788 = vmatpush1.msra.mxu0 0.0
        %789 = vmatprep.subr.mxu0 0.0
        %790 = vmatpush1.msra.mxu0 0.0
        %791 = vmatprep.subr.mxu0 0.0
        %792 = vmatpush1.msra.mxu0 0.0
        %793 = vmatprep.subr.mxu0 0.0
        %794 = vmatpush1.msra.mxu0 0.0
        %795 = vmatprep.subr.mxu0 0.0
        %796 = vmatpush1.msra.mxu0 0.0
        %797 = vmatprep.subr.mxu0 %v757
        %798 = vmatpush1.msra.mxu0 %v756
        %799 = vmatprep.subr.mxu0 %v755
        %800 = vmatpush1.msra.mxu0 %v754
        %801 = vmatprep.subr.mxu0 %v753
        %802 = vmatpush1.msra.mxu0 %v752
        %803 = vmatprep.subr.mxu0 %v751
        %804 = vmatpush1.msra.mxu0 %v750
        %805 = vmatprep.subr.mxu0 0.0
        %806 = vmatpush2.msra.mxu0 0.0
        %807 = vmatprep.subr.mxu0 0.0
        %808 = vmatpush2.msra.mxu0 0.0
        %809 = vmatprep.subr.mxu0 0.0
        %810 = vmatpush2.msra.mxu0 0.0
        %811 = vmatprep.subr.mxu0 0.0
        %812 = vmatpush2.msra.mxu0 0.0
        %813 = vmatprep.subr.mxu0 0.0
        %814 = vmatpush2.msra.mxu0 0.0
        %815 = vmatprep.subr.mxu0 0.0
        %816 = vmatpush2.msra.mxu0 0.0
        %817 = vmatprep.subr.mxu0 0.0
        %818 = vmatpush2.msra.mxu0 0.0
        %819 = vmatprep.subr.mxu0 0.0
        %820 = vmatpush2.msra.mxu0 0.0
        %821 = vmatprep.subr.mxu0 0.0
        %822 = vmatpush2.msra.mxu0 0.0
        %823 = vmatprep.subr.mxu0 0.0
        %824 = vmatpush2.msra.mxu0 0.0
        %825 = vmatprep.subr.mxu0 0.0
        %826 = vmatpush2.msra.mxu0 0.0
        %827 = vmatprep.subr.mxu0 0.0
        %828 = vmatpush2.msra.mxu0 0.0
        %829 = vmatprep.subr.mxu0 0.0
        %830 = vmatpush2.msra.mxu0 0.0
        %831 = vmatprep.subr.mxu0 0.0
        %832 = vmatpush2.msra.mxu0 0.0
        %833 = vmatprep.subr.mxu0 0.0
        %834 = vmatpush2.msra.mxu0 0.0
        %835 = vmatprep.subr.mxu0 0.0
        %836 = vmatpush2.msra.mxu0 0.0
        %837 = vmatprep.mubr.f32.mxu0 0.0
        %838 = vmatmul.mubr.f32.gmra.mxu0 %v771
        %v839 = vpop.f32.mrf.mxu0
        %v840 = vadd.f32 %v768, %v839
        %v841 = vpop.f32.mrf.mxu0
        %v842 = vadd.f32 %v768, %v841
        %843 = vdwg.mxu0
        %v844 = vtanh.pop %v840
        %v845 = vtanh.pop %v842
        %v848 = vcombine.low %v844, %v845
        %v850 = vunpack.c.l.s4 1966171168
        %v851 = vunpack.c.0.s8 %v850
        %v852 = vlaneseq
        %v853 = vshrl.u32 %v852, 7
        %v854 = vsub.s32 %v851, %v853
        %v855 = vrot.slane %v848, %v854
        %v857 = vunpack.c.l.s4 1966171168
        %v858 = vunpack.c.0.s8 %v857
        %v859 = vlaneseq
        %v860 = vshrl.u32 %v859, 7
        %v861 = vsub.s32 %v858, %v860
        %v862 = vrot.slane %v855, %v861
        %v864 = vlaneseq
        %vm865 = vcmp.ge.s32.totalorder %v864, 0
        %vm866 = vcmp.lt.s32.totalorder %v864, 256
        %vm867 = vmand %vm865, %vm866
        %868 = vst.msk [vmem:[%s274] sm:$0x3] %vm867, %v862
        %s869 = sand.u32 %s183, 1
        %s870 = scalar_lea.sflag [#allocation4], %s869
        %s871 = sand.u32 %s183, 1
        %s872 = smul.addr %s871, 2
        %s873 = scalar_lea.vmem [#allocation3], %s872
        // Predicated region
        $region49: #{tpu_custom_call.1} parent=47 // pred_check
          %p874 = pneg %p193
        $region50: #{tpu_custom_call.1} parent=47 // pred_check_branch
          %876 = sbr.rel (%p874) target = $region52
        $region51: #{tpu_custom_call.1} parent=47 // pred_region
          %s877 = smul.u32 2, %s23
          %s879 = ssub.s32 32, 32
          %880 = vsyncadd %s870, %s879
          %s881 = smul.addr %s877, 16
          %s882 = scalar_lea.hbm %s7, %s881
          %s884 = sshll.u32 %s873, 4
          %s885 = int_to_ptr.vmem [resolvable:$true] %s884
          %887 = dma.vmem_to_hbm [thread:$0]  %s885, 32, %s882, %s870
        $region52: #{tpu_custom_call.1} parent=47 // pred_fallthru
          _
      $region48: #{tpu_custom_call.1} parent=5 // pred_fallthru
        _
      %p888 = scmp.le.s32.totalorder 2, %s18
      // Predicated region
      $region53: #{tpu_custom_call.1} parent=5 // pred_check
        %p889 = pneg %p888
      $region54: #{tpu_custom_call.1} parent=5 // pred_check_branch
        %891 = sbr.rel (%p889) target = $region56
      $region55: #{tpu_custom_call.1} parent=5 // pred_region
        %s892 = ssub.s32 %s18, 2
        // Predicated region
        $region57: #{tpu_custom_call.1} parent=55 // pred_check
          %p893 = pneg %p199
        $region58: #{tpu_custom_call.1} parent=55 // pred_check_branch
          %895 = sbr.rel (%p893) target = $region60
        $region59: #{tpu_custom_call.1} parent=55 // pred_region
          %s896 = sand.u32 %s184, 1
          %s897 = scalar_lea.sflag [#allocation4], %s896
          %s898 = sand.u32 %s184, 1
          %s899 = smul.addr %s898, 2
          %s900 = scalar_lea.vmem [#allocation3], %s899
          %901 = dma.done %s897, 32
        $region60: #{tpu_custom_call.1} parent=55 // pred_fallthru
          _
      $region56: #{tpu_custom_call.1} parent=5 // pred_fallthru
        _
    $region6: #{tpu_custom_call.1} parent=1 // loop_footer
      %s22 = sadd.s32 1, %s18
    $region7: #{tpu_custom_call.1} parent=1 // loop_footer_branch
      %17 = sbr.rel target = $region3
    $region8: #{tpu_custom_call.1} parent=1 // loop_exit
      _
    %902 = vsyncpa [#allocation4], 1
    %s903 = scalar_lea.sflag [#allocation4], 1
    %904 = vsyncpa %s903, 1

</llo_original>
